<compile_context>
chip_gen: v7x
topology: tpu7x:2x2x1
jax: 0.10.0
libtpu: 0.0.40
codegen_flags: <defaults>
</compile_context>

<pallas_src>
import functools

import jax
import jax.numpy as jnp
from jax.experimental import pallas as pl
from jax.experimental.pallas import tpu as pltpu

INPUT_SIZE = 56
H1 = INPUT_SIZE * 2      # 112
H2 = INPUT_SIZE * 4      # 224
OUT = 6

# hidden dims padded to lane-aligned sizes; output padded only to 8
H1_P = 128
H2_P = 256
OUT_P = 8


def _round_up(n, m):
    return (n + m - 1) // m * m


def imitator_kernel(x_ref, w1_ref, b1_ref, w2_ref, b2_ref, w3_ref, b3_ref, o_ref):
    # in-kernel bf16 cast of the streamed f32 activations (free VPU op; avoids an
    # extra HBM round-trip that a wrapper-side astype would cost)
    x = x_ref[...].astype(jnp.bfloat16)
    # layer 1: (TB,56) @ (56,128) on the MXU, f32 accumulate; bias + ReLU in f32
    h1 = jnp.dot(x, w1_ref[...], preferred_element_type=jnp.float32)
    h1 = jnp.maximum(h1 + b1_ref[...], 0.0).astype(jnp.bfloat16)
    # layer 2: (TB,128) @ (128,256)
    h2 = jnp.dot(h1, w2_ref[...], preferred_element_type=jnp.float32)
    h2 = jnp.maximum(h2 + b2_ref[...], 0.0).astype(jnp.bfloat16)
    # classifier: (TB,256) @ (256,8) -- narrow N still uses one MXU column tile;
    # zero-padded cols 6..7 are exact (zero weights + zero bias)
    out = jnp.dot(h2, w3_ref[...], preferred_element_type=jnp.float32)
    o_ref[...] = (out + b3_ref[...]).astype(o_ref.dtype)


def init_params(key):
    """Deterministic PyTorch-style init: U(-1/sqrt(fan_in), 1/sqrt(fan_in)).
    Weights stored as (in_features, out_features) so y = x @ W + b (== Linear with W.T)."""
    ks = jax.random.split(key, 6)

    def lin(kw, kb, fan_in, fan_out):
        bound = 1.0 / jnp.sqrt(fan_in)
        w = jax.random.uniform(kw, (fan_in, fan_out), jnp.float32, -bound, bound)
        b = jax.random.uniform(kb, (1, fan_out), jnp.float32, -bound, bound)
        return w, b

    w1, b1 = lin(ks[0], ks[1], INPUT_SIZE, H1)
    w2, b2 = lin(ks[2], ks[3], H1, H2)
    w3, b3 = lin(ks[4], ks[5], H2, OUT)
    return (w1, b1, w2, b2, w3, b3)


def pad_params(params):
    """Zero-pad weights/biases to kernel shapes; weights cast once to bf16."""
    w1, b1, w2, b2, w3, b3 = params

    def pad2(a, rows, cols):
        return jnp.pad(a, ((0, rows - a.shape[0]), (0, cols - a.shape[1])))

    w1p = pad2(w1, INPUT_SIZE, H1_P).astype(jnp.bfloat16)
    w2p = pad2(w2, H1_P, H2_P).astype(jnp.bfloat16)
    w3p = pad2(w3, H2_P, OUT_P).astype(jnp.bfloat16)
    b1p = pad2(b1, 1, H1_P)   # biases stay f32 (added to f32 accumulator)
    b2p = pad2(b2, 1, H2_P)
    b3p = pad2(b3, 1, OUT_P)
    return (w1p, b1p, w2p, b2p, w3p, b3p)


@functools.partial(jax.jit, static_argnames=("tile_b",))
def imitator_forward(x, padded_params, tile_b=512):
    w1, b1, w2, b2, w3, b3 = padded_params
    B = x.shape[0]

    # Batch tile: aim for >=2 roughly equal tiles (v7x megacore) up to tile_b,
    # defensively rounded to a multiple of 16 (bf16 sublane packing of x in-kernel).
    half = _round_up(-(-B // 2), 16)
    tb = _round_up(max(16, min(tile_b, half)), 16)
    B_pad = _round_up(B, tb)

    if B_pad != B:
        x = jnp.pad(x, ((0, B_pad - B), (0, 0)))   # f32 pad; no wrapper-side dtype cast

    # weights / biases: same block every grid step -> fetched once, VMEM-resident
    wspec = lambda a: pl.BlockSpec(a.shape, lambda i: (0, 0))

    grid = B_pad // tb
    flops = 2 * B_pad * (INPUT_SIZE * H1_P + H1_P * H2_P + H2_P * OUT_P)
    bytes_accessed = (
        B_pad * INPUT_SIZE * 4                     # x read (f32)
        + B_pad * OUT_P * 4                        # output write (f32, 8 cols)
        + (INPUT_SIZE * H1_P + H1_P * H2_P + H2_P * OUT_P) * 2   # bf16 weights
        + (H1_P + H2_P + OUT_P) * 4                # f32 biases
    )

    out_padded = pl.pallas_call(
        imitator_kernel,
        out_shape=jax.ShapeDtypeStruct((B_pad, OUT_P), jnp.float32),
        grid_spec=pltpu.PrefetchScalarGridSpec(
            num_scalar_prefetch=0,
            grid=(grid,),
            in_specs=[
                pl.BlockSpec((tb, INPUT_SIZE), lambda i: (i, 0)),   # x (f32) streams by batch tile
                wspec(w1), wspec(b1),
                wspec(w2), wspec(b2),
                wspec(w3), wspec(b3),
            ],
            out_specs=pl.BlockSpec((tb, OUT_P), lambda i: (i, 0)),
        ),
        compiler_params=pltpu.CompilerParams(
            dimension_semantics=("parallel",),   # shard batch tiles across TCs on v7x
        ),
        cost_estimate=pl.CostEstimate(
            flops=flops, transcendentals=0, bytes_accessed=bytes_accessed),
    )(x, w1, b1, w2, b2, w3, b3)

    return out_padded[:B, :OUT]


def reference_forward_f32(x, params):
    w1, b1, w2, b2, w3, b3 = params
    h1 = jnp.maximum(x @ w1 + b1, 0.0)
    h2 = jnp.maximum(h1 @ w2 + b2, 0.0)
    return h2 @ w3 + b3


def reference_forward_bf16(x, params):
    """Pure-JAX reference matching the kernel's bf16-in / f32-accumulate numerics."""
    w1, b1, w2, b2, w3, b3 = params
    bf = jnp.bfloat16
    h1 = jnp.maximum(
        jnp.dot(x.astype(bf), w1.astype(bf), preferred_element_type=jnp.float32) + b1, 0.0)
    h2 = jnp.maximum(
        jnp.dot(h1.astype(bf), w2.astype(bf), preferred_element_type=jnp.float32) + b2, 0.0)
    return jnp.dot(h2.astype(bf), w3.astype(bf), preferred_element_type=jnp.float32) + b3


if __name__ == "__main__":
    key = jax.random.PRNGKey(0)
    kx, kx2, kp = jax.random.split(key, 3)

    params = init_params(kp)
    padded = pad_params(params)

    # --- small batch (matches the module's typical use) ---
    batch = 8
    x = jax.random.normal(kx, (batch, INPUT_SIZE), jnp.float32)
    out = jax.block_until_ready(imitator_forward(x, padded))
    assert out.shape == (batch, OUT)

    ref_bf16 = reference_forward_bf16(x, params)
    ref_f32 = reference_forward_f32(x, params)
    assert jnp.allclose(out, ref_bf16, atol=1e-3, rtol=1e-3), "mismatch vs bf16 reference"
    assert jnp.allclose(out, ref_f32, atol=5e-2, rtol=5e-2), "mismatch vs f32 reference"

    # --- larger, non-multiple batch exercises the multi-tile grid + padding path ---
    batch2 = 1000
    x2 = jax.random.normal(kx2, (batch2, INPUT_SIZE), jnp.float32)
    out2 = jax.block_until_ready(imitator_forward(x2, padded, tile_b=512))
    assert out2.shape == (batch2, OUT)
    assert jnp.allclose(out2, reference_forward_bf16(x2, params), atol=1e-3, rtol=1e-3), \
        "mismatch vs bf16 reference (tiled batch)"

    print("KERNEL_OK")
</pallas_src>

<mosaic_0001>
module attributes {stable_mosaic.version = 11 : i64} {
  func.func @imitator_kernel(%arg0: i32, %arg1: memref<16x56xf32, #tpu.memory_space<vmem>>, %arg2: memref<56x128xbf16, #tpu.memory_space<vmem>>, %arg3: memref<1x128xf32, #tpu.memory_space<vmem>>, %arg4: memref<128x256xbf16, #tpu.memory_space<vmem>>, %arg5: memref<1x256xf32, #tpu.memory_space<vmem>>, %arg6: memref<256x8xbf16, #tpu.memory_space<vmem>>, %arg7: memref<1x8xf32, #tpu.memory_space<vmem>>, %arg8: memref<16x8xf32, #tpu.memory_space<vmem>>) attributes {dimension_semantics = [#tpu.dimension_semantics<parallel>], iteration_bounds = array<i64: 1>, scalar_prefetch = 0 : i64, scratch_operands = 0 : i64, tpu.core_type = #tpu.core_type<tc>, window_params = [{transform_indices = @transform_0, window_bounds = array<i64: 16, 56>}, {pipeline_mode = #tpu.pipeline_mode<synchronous>, transform_indices = @transform_1, window_bounds = array<i64: 56, 128>}, {pipeline_mode = #tpu.pipeline_mode<synchronous>, transform_indices = @transform_2, window_bounds = array<i64: 1, 128>}, {pipeline_mode = #tpu.pipeline_mode<synchronous>, transform_indices = @transform_3, window_bounds = array<i64: 128, 256>}, {pipeline_mode = #tpu.pipeline_mode<synchronous>, transform_indices = @transform_4, window_bounds = array<i64: 1, 256>}, {pipeline_mode = #tpu.pipeline_mode<synchronous>, transform_indices = @transform_5, window_bounds = array<i64: 256, 8>}, {pipeline_mode = #tpu.pipeline_mode<synchronous>, transform_indices = @transform_6, window_bounds = array<i64: 1, 8>}, {transform_indices = @transform_7, window_bounds = array<i64: 16, 8>}]} {
    %c0 = arith.constant 0 : index
    %c0_0 = arith.constant 0 : index
    %0 = vector.load %arg1[%c0, %c0_0] : memref<16x56xf32, #tpu.memory_space<vmem>>, vector<16x56xf32>
    %1 = arith.truncf %0 : vector<16x56xf32> to vector<16x56xbf16>
    %c0_1 = arith.constant 0 : index
    %c0_2 = arith.constant 0 : index
    %2 = vector.load %arg2[%c0_1, %c0_2] : memref<56x128xbf16, #tpu.memory_space<vmem>>, vector<56x128xbf16>
    %cst = arith.constant dense<0.000000e+00> : vector<16x128xf32>
    %3 = tpu.matmul %1, %2, %cst {dimension_numbers = #tpu.dot_dimension_numbers<[1], [0], [0], [1], [0, 0, 1, 1], [], []>} : vector<16x56xbf16>, vector<56x128xbf16>, vector<16x128xf32> -> vector<16x128xf32>
    %c0_3 = arith.constant 0 : index
    %c0_4 = arith.constant 0 : index
    %4 = vector.load %arg3[%c0_3, %c0_4] : memref<1x128xf32, #tpu.memory_space<vmem>>, vector<1x128xf32>
    %5 = vector.broadcast %4 : vector<1x128xf32> to vector<16x128xf32>
    %6 = arith.addf %3, %5 : vector<16x128xf32>
    %cst_5 = arith.constant 0.000000e+00 : f32
    %7 = vector.broadcast %cst_5 : f32 to vector<16x128xf32>
    %8 = arith.maximumf %6, %7 : vector<16x128xf32>
    %9 = arith.truncf %8 : vector<16x128xf32> to vector<16x128xbf16>
    %c0_6 = arith.constant 0 : index
    %c0_7 = arith.constant 0 : index
    %10 = vector.load %arg4[%c0_6, %c0_7] : memref<128x256xbf16, #tpu.memory_space<vmem>>, vector<128x256xbf16>
    %cst_8 = arith.constant dense<0.000000e+00> : vector<16x256xf32>
    %11 = tpu.matmul %9, %10, %cst_8 {dimension_numbers = #tpu.dot_dimension_numbers<[1], [0], [0], [1], [0, 0, 1, 1], [], []>} : vector<16x128xbf16>, vector<128x256xbf16>, vector<16x256xf32> -> vector<16x256xf32>
    %c0_9 = arith.constant 0 : index
    %c0_10 = arith.constant 0 : index
    %12 = vector.load %arg5[%c0_9, %c0_10] : memref<1x256xf32, #tpu.memory_space<vmem>>, vector<1x256xf32>
    %13 = vector.broadcast %12 : vector<1x256xf32> to vector<16x256xf32>
    %14 = arith.addf %11, %13 : vector<16x256xf32>
    %cst_11 = arith.constant 0.000000e+00 : f32
    %15 = vector.broadcast %cst_11 : f32 to vector<16x256xf32>
    %16 = arith.maximumf %14, %15 : vector<16x256xf32>
    %17 = arith.truncf %16 : vector<16x256xf32> to vector<16x256xbf16>
    %c0_12 = arith.constant 0 : index
    %c0_13 = arith.constant 0 : index
    %18 = vector.load %arg6[%c0_12, %c0_13] : memref<256x8xbf16, #tpu.memory_space<vmem>>, vector<256x8xbf16>
    %cst_14 = arith.constant dense<0.000000e+00> : vector<16x8xf32>
    %19 = tpu.matmul %17, %18, %cst_14 {dimension_numbers = #tpu.dot_dimension_numbers<[1], [0], [0], [1], [0, 0, 1, 1], [], []>} : vector<16x256xbf16>, vector<256x8xbf16>, vector<16x8xf32> -> vector<16x8xf32>
    %c0_15 = arith.constant 0 : index
    %c0_16 = arith.constant 0 : index
    %20 = vector.load %arg7[%c0_15, %c0_16] : memref<1x8xf32, #tpu.memory_space<vmem>>, vector<1x8xf32>
    %21 = vector.broadcast %20 : vector<1x8xf32> to vector<16x8xf32>
    %22 = arith.addf %19, %21 : vector<16x8xf32>
    %c0_17 = arith.constant 0 : index
    %c0_18 = arith.constant 0 : index
    %23 = vector.load %arg8[%c0_17, %c0_18] : memref<16x8xf32, #tpu.memory_space<vmem>>, vector<16x8xf32>
    tpu.vector_store %arg8[%c0_17, %c0_18], %22 {strides = array<i32>} : memref<16x8xf32, #tpu.memory_space<vmem>>, vector<16x8xf32>,
    return
  }
  func.func @transform_0(%arg0: i32) -> (i32, i32) {
    %c0_i32 = arith.constant 0 : i32
    %c0_i32_0 = arith.constant 0 : i32
    return %arg0, %c0_i32 : i32, i32
  }
  func.func @transform_1(%arg0: i32) -> (i32, i32) {
    %c0_i32 = arith.constant 0 : i32
    %c0_i32_0 = arith.constant 0 : i32
    %c0_i32_1 = arith.constant 0 : i32
    return %c0_i32, %c0_i32_0 : i32, i32
  }
  func.func @transform_2(%arg0: i32) -> (i32, i32) {
    %c0_i32 = arith.constant 0 : i32
    %c0_i32_0 = arith.constant 0 : i32
    %c0_i32_1 = arith.constant 0 : i32
    return %c0_i32, %c0_i32_0 : i32, i32
  }
  func.func @transform_3(%arg0: i32) -> (i32, i32) {
    %c0_i32 = arith.constant 0 : i32
    %c0_i32_0 = arith.constant 0 : i32
    %c0_i32_1 = arith.constant 0 : i32
    return %c0_i32, %c0_i32_0 : i32, i32
  }
  func.func @transform_4(%arg0: i32) -> (i32, i32) {
    %c0_i32 = arith.constant 0 : i32
    %c0_i32_0 = arith.constant 0 : i32
    %c0_i32_1 = arith.constant 0 : i32
    return %c0_i32, %c0_i32_0 : i32, i32
  }
  func.func @transform_5(%arg0: i32) -> (i32, i32) {
    %c0_i32 = arith.constant 0 : i32
    %c0_i32_0 = arith.constant 0 : i32
    %c0_i32_1 = arith.constant 0 : i32
    return %c0_i32, %c0_i32_0 : i32, i32
  }
  func.func @transform_6(%arg0: i32) -> (i32, i32) {
    %c0_i32 = arith.constant 0 : i32
    %c0_i32_0 = arith.constant 0 : i32
    %c0_i32_1 = arith.constant 0 : i32
    return %c0_i32, %c0_i32_0 : i32, i32
  }
  func.func @transform_7(%arg0: i32) -> (i32, i32) {
    %c0_i32 = arith.constant 0 : i32
    %c0_i32_0 = arith.constant 0 : i32
    return %arg0, %c0_i32 : i32, i32
  }
}

</mosaic_0001>

<llo_original>
// kernel: imitator_forward.1
$region0: #{imitator_forward.1}
  #allocation0 [shape = 'u32[]', space=smem, size = 0x4, offset = 0x4, fixed_abs, tag = 'smem constant byte address 0x4 - core index']
  #allocation1 [shape = 'u32[144,128]{1,0:T(1,128)}', space=vmem, size = 0x12000, scoped, tag = 'internal scratch']
  %s0 = inlined_call_operand.vmem [shape: f32[16,56], index: 0, kind: input, shape index: {}]
  %s1 = inlined_call_operand.vmem [shape: bf16[56,128], index: 1, kind: input, shape index: {}]
  %s2 = inlined_call_operand.vmem [shape: f32[1,128], index: 2, kind: input, shape index: {}]
  %s3 = inlined_call_operand.vmem [shape: bf16[128,256], index: 3, kind: input, shape index: {}]
  %s4 = inlined_call_operand.vmem [shape: f32[1,256], index: 4, kind: input, shape index: {}]
  %s5 = inlined_call_operand.vmem [shape: bf16[256,8], index: 5, kind: input, shape index: {}]
  %s6 = inlined_call_operand.vmem [shape: f32[1,8], index: 6, kind: input, shape index: {}]
  %s7 = inlined_call_operand.vmem [shape: f32[16,8], index: 7, kind: output, shape index: {}]
  %s8 = sld [smem:[#allocation0]]
  $region38: #{imitator_forward.1} parent=0
    _
  %s10 = ssub.s32 1, %s8
  %s11 = scalar_select 0, %s10, %s8
  // Predicated region
  $region2: #{imitator_forward.1} parent=0 // pred_check
    _
  $region3: #{imitator_forward.1} parent=0 // pred_check_branch
    %13 = sbr.rel (0) target = $region5
  $region4: #{imitator_forward.1} parent=0 // pred_region
    _
  $region5: #{imitator_forward.1} parent=0 // pred_fallthru
    _
  // Predicated region
  $region6: #{imitator_forward.1} parent=0 // pred_check
    _
  $region7: #{imitator_forward.1} parent=0 // pred_check_branch
    %15 = sbr.rel (0) target = $region9
  $region8: #{imitator_forward.1} parent=0 // pred_region
    _
  $region9: #{imitator_forward.1} parent=0 // pred_fallthru
    _
  // Predicated region
  $region10: #{imitator_forward.1} parent=0 // pred_check
    _
  $region11: #{imitator_forward.1} parent=0 // pred_check_branch
    %17 = sbr.rel (0) target = $region13
  $region12: #{imitator_forward.1} parent=0 // pred_region
    _
  $region13: #{imitator_forward.1} parent=0 // pred_fallthru
    _
  // Predicated region
  $region14: #{imitator_forward.1} parent=0 // pred_check
    _
  $region15: #{imitator_forward.1} parent=0 // pred_check_branch
    %19 = sbr.rel (0) target = $region17
  $region16: #{imitator_forward.1} parent=0 // pred_region
    _
  $region17: #{imitator_forward.1} parent=0 // pred_fallthru
    _
  // Predicated region
  $region18: #{imitator_forward.1} parent=0 // pred_check
    _
  $region19: #{imitator_forward.1} parent=0 // pred_check_branch
    %21 = sbr.rel (0) target = $region21
  $region20: #{imitator_forward.1} parent=0 // pred_region
    _
  $region21: #{imitator_forward.1} parent=0 // pred_fallthru
    _
  // Predicated region
  $region22: #{imitator_forward.1} parent=0 // pred_check
    _
  $region23: #{imitator_forward.1} parent=0 // pred_check_branch
    %23 = sbr.rel (0) target = $region25
  $region24: #{imitator_forward.1} parent=0 // pred_region
    _
  $region25: #{imitator_forward.1} parent=0 // pred_fallthru
    _
  // Predicated region
  $region26: #{imitator_forward.1} parent=0 // pred_check
    _
  $region27: #{imitator_forward.1} parent=0 // pred_check_branch
    %25 = sbr.rel (0) target = $region29
  $region28: #{imitator_forward.1} parent=0 // pred_region
    _
  $region29: #{imitator_forward.1} parent=0 // pred_fallthru
    _
  %v27 = vld [vmem:[%s0] sm:$0xff]
  %v28 = vld [vmem:[%s0 + $0x8] sm:$0xff]
  %v29 = vpack.c.bf16 %v28, %v27
  %v30 = vld [vmem:[%s1] sm:$0xf]
  %v31 = vld [vmem:[%s1 + $0x4] sm:$0xf]
  %v32 = vld [vmem:[%s1 + $0x8] sm:$0xf]
  %v33 = vld [vmem:[%s1 + $0xc] sm:$0xf]
  %v34 = vld [vmem:[%s1 + $0x10] sm:$0xf]
  %v35 = vld [vmem:[%s1 + $0x14] sm:$0xf]
  %v36 = vld [vmem:[%s1 + $0x18] sm:$0xf]
  %v37 = vld [vmem:[%s2] sm:$0x1]
  %v39 = vlaneseq
  %v40 = vshrl.u32 %v39, 7
  %v41 = vsub.s32 0, %v40
  %v42 = vrot.slane %v37, %v41
  %v51 = vunpack.c.l.b16 %v30
  %v52 = vunpack.c.l.b16 %v31
  %v53 = vunpack.c.l.b16 %v32
  %v54 = vunpack.c.l.b16 %v33
  %v55 = vunpack.c.l.b16 %v34
  %v56 = vunpack.c.l.b16 %v35
  %v57 = vunpack.c.l.b16 %v36
  %v58 = vpack.c.b16 %v52, %v51
  %v59 = vpack.c.b16 %v54, %v53
  %v60 = vpack.c.b16 %v56, %v55
  %v61 = vpack.c.b16 %v57, %v57
  %vm65 = vcmask 457728
  %v67 = vsel %vm65, %v29, 0
  %vm69 = vcmask 1043456
  %v71 = vsel %vm69, %v61, 0
  %73 = vmatprep.subr.bf16.mxu0 0
  %74 = vmatpush1.bf16.msra.mxu0 %v58
  %75 = vmatprep.subr.bf16.mxu0 0
  %76 = vmatpush1.bf16.msra.mxu0 %v59
  %77 = vmatprep.subr.bf16.mxu0 0
  %78 = vmatpush1.bf16.msra.mxu0 %v60
  %79 = vmatprep.subr.bf16.mxu0 0
  %80 = vmatpush1.bf16.msra.mxu0 %v71
  %81 = vmatprep.subr.bf16.mxu0 0
  %82 = vmatpush1.bf16.msra.mxu0 0
  %83 = vmatprep.subr.bf16.mxu0 0
  %84 = vmatpush1.bf16.msra.mxu0 0
  %85 = vmatprep.subr.bf16.mxu0 0
  %86 = vmatpush1.bf16.msra.mxu0 0
  %87 = vmatprep.subr.bf16.mxu0 0
  %88 = vmatpush1.bf16.msra.mxu0 0
  %89 = vmatprep.subr.bf16.mxu0 0
  %90 = vmatpush1.bf16.msra.mxu0 0
  %91 = vmatprep.subr.bf16.mxu0 0
  %92 = vmatpush1.bf16.msra.mxu0 0
  %93 = vmatprep.subr.bf16.mxu0 0
  %94 = vmatpush1.bf16.msra.mxu0 0
  %95 = vmatprep.subr.bf16.mxu0 0
  %96 = vmatpush1.bf16.msra.mxu0 0
  %97 = vmatprep.subr.bf16.mxu0 0
  %98 = vmatpush1.bf16.msra.mxu0 0
  %99 = vmatprep.subr.bf16.mxu0 0
  %100 = vmatpush1.bf16.msra.mxu0 0
  %101 = vmatprep.subr.bf16.mxu0 0
  %102 = vmatpush1.bf16.msra.mxu0 0
  %103 = vmatprep.subr.bf16.mxu0 0
  %104 = vmatpush1.bf16.msra.mxu0 0
  %105 = vmatprep.mubr.bf16.mxu0 0
  %106 = vmatmul.mubr.bf16.gmra.mrb[0].mxu0 %v67
  %v107 = vpop.f32.mrb[0].mxu0
  %v108 = vadd.f32 %v42, %v107
  %v109 = vpop.f32.mrb[0].mxu0
  %v110 = vpop.f32.mrb[0].mxu0
  %v111 = vadd.f32 %v42, %v110
  %v112 = vpop.f32.mrb[0].mxu0
  %113 = vdwg.mxu0
  %v114 = vmax.f32 %v108, 0.0
  %v115 = vmax.f32 %v111, 0.0
  %v116 = vpack.c.bf16 %v115, %v114
  %v117 = vld [vmem:[%s3] sm:$0xff]
  %v118 = vld [vmem:[%s3 + $0x8] sm:$0xff]
  %v119 = vld [vmem:[%s3 + $0x10] sm:$0xff]
  %v120 = vld [vmem:[%s3 + $0x18] sm:$0xff]
  %v121 = vld [vmem:[%s3 + $0x20] sm:$0xff]
  %v122 = vld [vmem:[%s3 + $0x28] sm:$0xff]
  %v123 = vld [vmem:[%s3 + $0x30] sm:$0xff]
  %v124 = vld [vmem:[%s3 + $0x38] sm:$0xff]
  %v125 = vld [vmem:[%s3 + $0x40] sm:$0xff]
  %v126 = vld [vmem:[%s3 + $0x48] sm:$0xff]
  %v127 = vld [vmem:[%s3 + $0x50] sm:$0xff]
  %v128 = vld [vmem:[%s3 + $0x58] sm:$0xff]
  %v129 = vld [vmem:[%s3 + $0x60] sm:$0xff]
  %v130 = vld [vmem:[%s3 + $0x68] sm:$0xff]
  %v131 = vld [vmem:[%s3 + $0x70] sm:$0xff]
  %v132 = vld [vmem:[%s3 + $0x78] sm:$0xff]
  %v133 = vld [vmem:[%s4] sm:$0x3]
  %v135 = vlaneseq
  %v136 = vshrl.u32 %v135, 7
  %v137 = vsub.s32 0, %v136
  %v138 = vrot.slane %v133, %v137
  %v139 = vlaneseq
  %v140 = vshrl.u32 %v139, 7
  %v141 = vsub.s32 1, %v140
  %v142 = vrot.slane %v133, %v141
  %v161 = vunpack.c.l.b16 %v117
  %v162 = vunpack.c.h.b16 %v117
  %v163 = vunpack.c.l.b16 %v118
  %v164 = vunpack.c.h.b16 %v118
  %v165 = vunpack.c.l.b16 %v119
  %v166 = vunpack.c.h.b16 %v119
  %v167 = vunpack.c.l.b16 %v120
  %v168 = vunpack.c.h.b16 %v120
  %v169 = vunpack.c.l.b16 %v121
  %v170 = vunpack.c.h.b16 %v121
  %v171 = vunpack.c.l.b16 %v122
  %v172 = vunpack.c.h.b16 %v122
  %v173 = vunpack.c.l.b16 %v123
  %v174 = vunpack.c.h.b16 %v123
  %v175 = vunpack.c.l.b16 %v124
  %v176 = vunpack.c.h.b16 %v124
  %v177 = vunpack.c.l.b16 %v125
  %v178 = vunpack.c.h.b16 %v125
  %v179 = vunpack.c.l.b16 %v126
  %v180 = vunpack.c.h.b16 %v126
  %v181 = vunpack.c.l.b16 %v127
  %v182 = vunpack.c.h.b16 %v127
  %v183 = vunpack.c.l.b16 %v128
  %v184 = vunpack.c.h.b16 %v128
  %v185 = vunpack.c.l.b16 %v129
  %v186 = vunpack.c.h.b16 %v129
  %v187 = vunpack.c.l.b16 %v130
  %v188 = vunpack.c.h.b16 %v130
  %v189 = vunpack.c.l.b16 %v131
  %v190 = vunpack.c.h.b16 %v131
  %v191 = vunpack.c.l.b16 %v132
  %v192 = vunpack.c.h.b16 %v132
  %v193 = vpack.c.b16 %v163, %v161
  %v194 = vpack.c.b16 %v164, %v162
  %v195 = vpack.c.b16 %v167, %v165
  %v196 = vpack.c.b16 %v168, %v166
  %v197 = vpack.c.b16 %v171, %v169
  %v198 = vpack.c.b16 %v172, %v170
  %v199 = vpack.c.b16 %v175, %v173
  %v200 = vpack.c.b16 %v176, %v174
  %v201 = vpack.c.b16 %v179, %v177
  %v202 = vpack.c.b16 %v180, %v178
  %v203 = vpack.c.b16 %v183, %v181
  %v204 = vpack.c.b16 %v184, %v182
  %v205 = vpack.c.b16 %v187, %v185
  %v206 = vpack.c.b16 %v188, %v186
  %v207 = vpack.c.b16 %v191, %v189
  %v208 = vpack.c.b16 %v192, %v190
  %225 = vmatprep.subr.bf16.mxu0 %v194
  %226 = vmatpush1.bf16.msra.mxu0 %v193
  %227 = vmatprep.subr.bf16.mxu0 %v196
  %228 = vmatpush1.bf16.msra.mxu0 %v195
  %229 = vmatprep.subr.bf16.mxu0 %v198
  %230 = vmatpush1.bf16.msra.mxu0 %v197
  %231 = vmatprep.subr.bf16.mxu0 %v200
  %232 = vmatpush1.bf16.msra.mxu0 %v199
  %233 = vmatprep.subr.bf16.mxu0 %v202
  %234 = vmatpush1.bf16.msra.mxu0 %v201
  %235 = vmatprep.subr.bf16.mxu0 %v204
  %236 = vmatpush1.bf16.msra.mxu0 %v203
  %237 = vmatprep.subr.bf16.mxu0 %v206
  %238 = vmatpush1.bf16.msra.mxu0 %v205
  %239 = vmatprep.subr.bf16.mxu0 %v208
  %240 = vmatpush1.bf16.msra.mxu0 %v207
  %241 = vmatprep.subr.bf16.mxu0 0
  %242 = vmatpush1.bf16.msra.mxu0 0
  %243 = vmatprep.subr.bf16.mxu0 0
  %244 = vmatpush1.bf16.msra.mxu0 0
  %245 = vmatprep.subr.bf16.mxu0 0
  %246 = vmatpush1.bf16.msra.mxu0 0
  %247 = vmatprep.subr.bf16.mxu0 0
  %248 = vmatpush1.bf16.msra.mxu0 0
  %249 = vmatprep.subr.bf16.mxu0 0
  %250 = vmatpush1.bf16.msra.mxu0 0
  %251 = vmatprep.subr.bf16.mxu0 0
  %252 = vmatpush1.bf16.msra.mxu0 0
  %253 = vmatprep.subr.bf16.mxu0 0
  %254 = vmatpush1.bf16.msra.mxu0 0
  %255 = vmatprep.subr.bf16.mxu0 0
  %256 = vmatpush1.bf16.msra.mxu0 0
  %257 = vmatprep.mubr.bf16.mxu0 0
  %258 = vmatmul.mubr.bf16.gmra.mrb[0].mxu0 %v116
  %v259 = vpop.f32.mrb[0].mxu0
  %v260 = vadd.f32 %v138, %v259
  %v261 = vpop.f32.mrb[0].mxu0
  %v262 = vadd.f32 %v142, %v261
  %v263 = vpop.f32.mrb[0].mxu0
  %v264 = vadd.f32 %v138, %v263
  %v265 = vpop.f32.mrb[0].mxu0
  %v266 = vadd.f32 %v142, %v265
  %267 = vdwg.mxu0
  %v268 = vmax.f32 %v260, 0.0
  %v269 = vmax.f32 %v262, 0.0
  %v270 = vmax.f32 %v264, 0.0
  %v271 = vmax.f32 %v266, 0.0
  %v272 = vpack.c.bf16 %v270, %v268
  %v273 = vpack.c.bf16 %v271, %v269
  %v274 = vld [vmem:[%s5] sm:$0xf]
  %v275 = vld [vmem:[%s5 + $0x4] sm:$0xf]
  %v276 = vld [vmem:[%s5 + $0x8] sm:$0xf]
  %v277 = vld [vmem:[%s5 + $0xc] sm:$0xf]
  %v278 = vld [vmem:[%s5 + $0x10] sm:$0xf]
  %v279 = vld [vmem:[%s5 + $0x14] sm:$0xf]
  %v280 = vld [vmem:[%s5 + $0x18] sm:$0xf]
  %v281 = vld [vmem:[%s5 + $0x1c] sm:$0xf]
  %v282 = vld [vmem:[%s5 + $0x20] sm:$0xf]
  %v283 = vld [vmem:[%s5 + $0x24] sm:$0xf]
  %v284 = vld [vmem:[%s5 + $0x28] sm:$0xf]
  %v285 = vld [vmem:[%s5 + $0x2c] sm:$0xf]
  %v286 = vld [vmem:[%s5 + $0x30] sm:$0xf]
  %v287 = vld [vmem:[%s5 + $0x34] sm:$0xf]
  %v288 = vld [vmem:[%s5 + $0x38] sm:$0xf]
  %v289 = vld [vmem:[%s5 + $0x3c] sm:$0xf]
  %v290 = vld [vmem:[%s5 + $0x40] sm:$0xf]
  %v291 = vld [vmem:[%s5 + $0x44] sm:$0xf]
  %v292 = vld [vmem:[%s5 + $0x48] sm:$0xf]
  %v293 = vld [vmem:[%s5 + $0x4c] sm:$0xf]
  %v294 = vld [vmem:[%s5 + $0x50] sm:$0xf]
  %v295 = vld [vmem:[%s5 + $0x54] sm:$0xf]
  %v296 = vld [vmem:[%s5 + $0x58] sm:$0xf]
  %v297 = vld [vmem:[%s5 + $0x5c] sm:$0xf]
  %v298 = vld [vmem:[%s5 + $0x60] sm:$0xf]
  %v299 = vld [vmem:[%s5 + $0x64] sm:$0xf]
  %v300 = vld [vmem:[%s5 + $0x68] sm:$0xf]
  %v301 = vld [vmem:[%s5 + $0x6c] sm:$0xf]
  %v302 = vld [vmem:[%s5 + $0x70] sm:$0xf]
  %v303 = vld [vmem:[%s5 + $0x74] sm:$0xf]
  %v304 = vld [vmem:[%s5 + $0x78] sm:$0xf]
  %v305 = vld [vmem:[%s5 + $0x7c] sm:$0xf]
  %v306 = vld [vmem:[%s6] sm:$0x1]
  %v308 = vlaneseq
  %v309 = vshrl.u32 %v308, 7
  %v310 = vsub.s32 0, %v309
  %v311 = vrot.slane %v306, %v310
  %v345 = vunpack.c.l.b16 %v274
  %v346 = vunpack.c.l.b16 %v275
  %v347 = vunpack.c.l.b16 %v276
  %v348 = vunpack.c.l.b16 %v277
  %v349 = vunpack.c.l.b16 %v278
  %v350 = vunpack.c.l.b16 %v279
  %v351 = vunpack.c.l.b16 %v280
  %v352 = vunpack.c.l.b16 %v281
  %v353 = vunpack.c.l.b16 %v282
  %v354 = vunpack.c.l.b16 %v283
  %v355 = vunpack.c.l.b16 %v284
  %v356 = vunpack.c.l.b16 %v285
  %v357 = vunpack.c.l.b16 %v286
  %v358 = vunpack.c.l.b16 %v287
  %v359 = vunpack.c.l.b16 %v288
  %v360 = vunpack.c.l.b16 %v289
  %v361 = vunpack.c.l.b16 %v290
  %v362 = vunpack.c.l.b16 %v291
  %v363 = vunpack.c.l.b16 %v292
  %v364 = vunpack.c.l.b16 %v293
  %v365 = vunpack.c.l.b16 %v294
  %v366 = vunpack.c.l.b16 %v295
  %v367 = vunpack.c.l.b16 %v296
  %v368 = vunpack.c.l.b16 %v297
  %v369 = vunpack.c.l.b16 %v298
  %v370 = vunpack.c.l.b16 %v299
  %v371 = vunpack.c.l.b16 %v300
  %v372 = vunpack.c.l.b16 %v301
  %v373 = vunpack.c.l.b16 %v302
  %v374 = vunpack.c.l.b16 %v303
  %v375 = vunpack.c.l.b16 %v304
  %v376 = vunpack.c.l.b16 %v305
  %v377 = vpack.c.b16 %v346, %v345
  %v378 = vpack.c.b16 %v348, %v347
  %v379 = vpack.c.b16 %v350, %v349
  %v380 = vpack.c.b16 %v352, %v351
  %v381 = vpack.c.b16 %v354, %v353
  %v382 = vpack.c.b16 %v356, %v355
  %v383 = vpack.c.b16 %v358, %v357
  %v384 = vpack.c.b16 %v360, %v359
  %v385 = vpack.c.b16 %v362, %v361
  %v386 = vpack.c.b16 %v364, %v363
  %v387 = vpack.c.b16 %v366, %v365
  %v388 = vpack.c.b16 %v368, %v367
  %v389 = vpack.c.b16 %v370, %v369
  %v390 = vpack.c.b16 %v372, %v371
  %v391 = vpack.c.b16 %v374, %v373
  %v392 = vpack.c.b16 %v376, %v375
  %409 = vmatprep.subr.bf16.mxu0 0
  %410 = vmatpush1.bf16.msra.mxu0 %v377
  %411 = vmatprep.subr.bf16.mxu0 0
  %412 = vmatpush1.bf16.msra.mxu0 %v378
  %413 = vmatprep.subr.bf16.mxu0 0
  %414 = vmatpush1.bf16.msra.mxu0 %v379
  %415 = vmatprep.subr.bf16.mxu0 0
  %416 = vmatpush1.bf16.msra.mxu0 %v380
  %417 = vmatprep.subr.bf16.mxu0 0
  %418 = vmatpush1.bf16.msra.mxu0 %v381
  %419 = vmatprep.subr.bf16.mxu0 0
  %420 = vmatpush1.bf16.msra.mxu0 %v382
  %421 = vmatprep.subr.bf16.mxu0 0
  %422 = vmatpush1.bf16.msra.mxu0 %v383
  %423 = vmatprep.subr.bf16.mxu0 0
  %424 = vmatpush1.bf16.msra.mxu0 %v384
  %425 = vmatprep.subr.bf16.mxu0 0
  %426 = vmatpush1.bf16.msra.mxu0 %v385
  %427 = vmatprep.subr.bf16.mxu0 0
  %428 = vmatpush1.bf16.msra.mxu0 %v386
  %429 = vmatprep.subr.bf16.mxu0 0
  %430 = vmatpush1.bf16.msra.mxu0 %v387
  %431 = vmatprep.subr.bf16.mxu0 0
  %432 = vmatpush1.bf16.msra.mxu0 %v388
  %433 = vmatprep.subr.bf16.mxu0 0
  %434 = vmatpush1.bf16.msra.mxu0 %v389
  %435 = vmatprep.subr.bf16.mxu0 0
  %436 = vmatpush1.bf16.msra.mxu0 %v390
  %437 = vmatprep.subr.bf16.mxu0 0
  %438 = vmatpush1.bf16.msra.mxu0 %v391
  %439 = vmatprep.subr.bf16.mxu0 0
  %440 = vmatpush1.bf16.msra.mxu0 %v392
  %441 = vmatprep.mubr.bf16.mxu0 %v273
  %442 = vmatmul.mubr.bf16.gmra.mrb[0].mxu0 %v272
  %v443 = vpop.f32.mrb[0].mxu0
  %v444 = vadd.f32 %v311, %v443
  %v445 = vpop.f32.mrb[0].mxu0
  %v446 = vpop.f32.mrb[0].mxu0
  %v447 = vadd.f32 %v311, %v446
  %v448 = vpop.f32.mrb[0].mxu0
  %449 = vdwg.mxu0
  %vm450 = vcmask 64512
  %451 = vst.msk [vmem:[%s7] sm:$0xff] %vm450, %v444
  %452 = vst.msk [vmem:[%s7 + $0x8] sm:$0xff] %vm450, %v447
  // Predicated region
  $region30: #{imitator_forward.1} parent=0 // pred_check
    _
  $region31: #{imitator_forward.1} parent=0 // pred_check_branch
    %454 = sbr.rel (0) target = $region33
  $region32: #{imitator_forward.1} parent=0 // pred_region
    _
  $region33: #{imitator_forward.1} parent=0 // pred_fallthru
    _
  // Predicated region
  $region34: #{imitator_forward.1} parent=0 // pred_check
    _
  $region35: #{imitator_forward.1} parent=0 // pred_check_branch
    %456 = sbr.rel (0) target = $region37
  $region36: #{imitator_forward.1} parent=0 // pred_region
    _
  $region37: #{imitator_forward.1} parent=0 // pred_fallthru
    _

</llo_original>
